<compile_context>
chip_gen: v5e
topology: v5e:2x2
jax: 0.10.0
libtpu: 0.0.40
codegen_flags: <defaults>
</compile_context>

<pallas_src>
import functools

import jax
import jax.numpy as jnp
from jax.experimental import pallas as pl
from jax.experimental.pallas import tpu as pltpu

BN_EPS = 1e-5


def fused_kernel(p_ref, w_ref, g_ref, b_ref, wfc_ref, segt_ref, fcb_ref, o_ref, t_ref):
    # p_ref   : (K*K*Cin, B*P) bf16  im2col patches, lane-dense; cols ordered (b, ho, wo)
    # w_ref   : (Cout, K*K*Cin) bf16 conv weight (cols ordered (kh, kw, cin))
    # g_ref   : (Cout, 1) f32        BN gamma
    # b_ref   : (Cout, 1) f32        BN beta
    # wfc_ref : (O, Cout, B*P) f32   FC weight, cols matched to activation order, tiled over batch
    # segt_ref: (B*P, B) f32         1.0 where column r belongs to batch b (r // P == b)
    # fcb_ref : (O, 1) f32           FC bias
    # o_ref   : (O, B) f32           softmax probabilities (transposed; wrapper flips)
    # t_ref   : (O, B*P) f32 scratch per-class, per-position FC contributions

    # --- conv as a single MXU matmul (conv bias omitted: train-mode BN mean-sub cancels it) ---
    y = jnp.dot(w_ref[...], p_ref[...], preferred_element_type=jnp.float32)   # (Cout, BP) f32

    # --- BatchNorm2d, training-mode batch statistics, folded to one scale/shift pass ---
    # TODO(synk): running_mean/var buffer updates (training side effect) are not replicated;
    # they do not affect this forward output.
    mean = jnp.mean(y, axis=1, keepdims=True)                                  # (Cout, 1)
    msq = jnp.mean(y * y, axis=1, keepdims=True)                               # (Cout, 1)
    var = jnp.maximum(msq - mean * mean, 0.0)
    scale = g_ref[...] * jax.lax.rsqrt(var + BN_EPS)                           # (Cout, 1)
    shift = b_ref[...] - mean * scale                                          # (Cout, 1)

    # --- fused BN + ReLU (single elementwise pass over the (Cout, BP) tile) ---
    y = jnp.maximum(y * scale + shift, 0.0)

    # --- Linear(P*Cout -> O), reshape-free: per-class sublane reduction + ONE seg matmul ---
    n_cls = wfc_ref.shape[0]
    for o in range(n_cls):  # O = 3, fully unrolled
        t_ref[pl.ds(o, 1), :] = jnp.sum(y * wfc_ref[o], axis=0, keepdims=True)  # (1, BP)
    logits = jnp.dot(t_ref[...], segt_ref[...],
                     preferred_element_type=jnp.float32) + fcb_ref[...]          # (O, B)

    # --- softmax over classes (F.softmax on 2-D -> dim=1; classes are axis 0 here) ---
    m = jnp.max(logits, axis=0, keepdims=True)
    e = jnp.exp(logits - m)
    o_ref[...] = e / jnp.sum(e, axis=0, keepdims=True)


def _im2col_T(x_nchw, k):
    """im2col emitted directly in the kernel's transposed, lane-dense layout."""
    B, C, H, W = x_nchw.shape
    Ho, Wo = H - k + 1, W - k + 1
    taps = [x_nchw[:, :, kh:kh + Ho, kw:kw + Wo]
            for kh in range(k) for kw in range(k)]        # each (B, Cin, Ho, Wo)
    p = jnp.stack(taps, axis=0)                           # (K*K, B, Cin, Ho, Wo)
    p = jnp.transpose(p, (0, 2, 1, 3, 4))                 # (K*K, Cin, B, Ho, Wo)
    return p.reshape(k * k * C, B * Ho * Wo)              # rows (kh,kw,cin); cols (b,ho,wo)


def prepare_params(conv_w, gamma, beta, fc_w, fc_b, batch):
    """Static, once-per-model parameter repacking (kept out of the hot path)."""
    Cout, Cin, K, _ = conv_w.shape
    n_cls, F = fc_w.shape
    P = F // Cout                                                   # Ho*Wo
    # torch conv weight (Cout, Cin, KH, KW) -> (Cout, KH, KW, Cin) -> (Cout, K*K*Cin)
    # MXU-only operand -> bf16 (f32 accumulation in-kernel).
    w_matT = (jnp.transpose(conv_w, (0, 2, 3, 1))
              .reshape(Cout, K * K * Cin).astype(jnp.bfloat16))
    # torch flatten is (c, h, w)-major; reshape to (O, Cout, P) and tile the position axis
    # over batch so columns line up with the (Cout, B*P) activation. Kept f32 (VPU operand).
    wfc = jnp.tile(fc_w.reshape(n_cls, Cout, P), (1, 1, batch))     # (O, Cout, B*P)
    segt = (jnp.arange(batch * P)[:, None] // P
            == jnp.arange(batch)[None, :]).astype(jnp.float32)      # (B*P, B)
    return (w_matT, gamma.reshape(Cout, 1), beta.reshape(Cout, 1),
            wfc, segt, fc_b.reshape(n_cls, 1))


@functools.partial(jax.jit, static_argnames=("ksize",))
def forward(x_nchw, w_matT, gamma2, beta2, wfc, segt, fcb2, *, ksize):
    B = x_nchw.shape[0]
    n_cls = fcb2.shape[0]
    BP = wfc.shape[2]
    patches = _im2col_T(x_nchw, ksize).astype(jnp.bfloat16)   # (K*K*Cin, B*P), lane-dense

    vmem = pl.BlockSpec(memory_space=pltpu.MemorySpace.VMEM)
    out_t = pl.pallas_call(
        fused_kernel,
        out_shape=jax.ShapeDtypeStruct((n_cls, B), jnp.float32),
        in_specs=[vmem] * 7,
        out_specs=vmem,
        scratch_shapes=[pltpu.VMEM((n_cls, BP), jnp.float32)],
    )(patches, w_matT, gamma2, beta2, wfc, segt, fcb2)
    return out_t.T                                            # (B, n_cls)


if __name__ == "__main__":
    B, Cin, H, W = 2, 3, 16, 16            # Linear(3136, 3) implies 16x16 input -> 14x14x16 conv out
    Cout, K = 16, 3
    n_classes = 3

    key = jax.random.PRNGKey(0)
    kx, kw1, kb1, kw2, kb2 = jax.random.split(key, 5)

    x = jax.random.normal(kx, (B, Cin, H, W), dtype=jnp.float32)
    conv_w = jax.random.normal(kw1, (Cout, Cin, K, K), dtype=jnp.float32) * 0.1
    # conv bias is cancelled exactly by the train-mode BN mean subtraction -> unused in kernel
    conv_b = jax.random.normal(kb1, (Cout,), dtype=jnp.float32) * 0.1
    gamma = jnp.ones((Cout,), dtype=jnp.float32)       # BatchNorm2d default init
    beta = jnp.zeros((Cout,), dtype=jnp.float32)
    fc_w = jax.random.normal(kw2, (n_classes, Cout * (H - K + 1) * (W - K + 1)),
                             dtype=jnp.float32) * 0.02  # torch Linear weight layout (out, in)
    fc_b = jax.random.normal(kb2, (n_classes,), dtype=jnp.float32) * 0.02

    params = prepare_params(conv_w, gamma, beta, fc_w, fc_b, B)
    out = forward(x, *params, ksize=K)
    out = jax.block_until_ready(out)
    assert out.shape == (B, n_classes)
    assert bool(jnp.all(jnp.isfinite(out)))
    print("KERNEL_OK")
</pallas_src>

<mosaic_0001>
module attributes {stable_mosaic.version = 11 : i64} {
  func.func @fused_kernel(%arg0: memref<27x392xbf16, #tpu.memory_space<vmem>>, %arg1: memref<16x27xbf16, #tpu.memory_space<vmem>>, %arg2: memref<16x1xf32, #tpu.memory_space<vmem>>, %arg3: memref<16x1xf32, #tpu.memory_space<vmem>>, %arg4: memref<3x16x392xf32, #tpu.memory_space<vmem>>, %arg5: memref<392x2xf32, #tpu.memory_space<vmem>>, %arg6: memref<3x1xf32, #tpu.memory_space<vmem>>, %arg7: memref<3x2xf32, #tpu.memory_space<vmem>>, %arg8: memref<3x392xf32, #tpu.memory_space<vmem>>) attributes {dimension_semantics = [], scalar_prefetch = 0 : i64, scratch_operands = 1 : i64, tpu.core_type = #tpu.core_type<tc>} {
    %c0 = arith.constant 0 : index
    %c0_0 = arith.constant 0 : index
    %0 = vector.load %arg1[%c0, %c0_0] : memref<16x27xbf16, #tpu.memory_space<vmem>>, vector<16x27xbf16>
    %c0_1 = arith.constant 0 : index
    %c0_2 = arith.constant 0 : index
    %1 = vector.load %arg0[%c0_1, %c0_2] : memref<27x392xbf16, #tpu.memory_space<vmem>>, vector<27x392xbf16>
    %cst = arith.constant dense<0.000000e+00> : vector<16x392xf32>
    %2 = tpu.matmul %0, %1, %cst {dimension_numbers = #tpu.dot_dimension_numbers<[1], [0], [0], [1], [0, 0, 1, 1], [], []>} : vector<16x27xbf16>, vector<27x392xbf16>, vector<16x392xf32> -> vector<16x392xf32>
    %cst_3 = arith.constant dense<0.000000e+00> : vector<16xf32>
    %3 = vector.multi_reduction <add>, %2, %cst_3 [1] : vector<16x392xf32> to vector<16xf32>
    %4 = vector.shape_cast %3 : vector<16xf32> to vector<16x1xf32>
    %cst_4 = arith.constant 3.920000e+02 : f32
    %5 = vector.broadcast %cst_4 : f32 to vector<16x1xf32>
    %6 = arith.divf %4, %5 : vector<16x1xf32>
    %7 = arith.mulf %2, %2 : vector<16x392xf32>
    %cst_5 = arith.constant dense<0.000000e+00> : vector<16xf32>
    %8 = vector.multi_reduction <add>, %7, %cst_5 [1] : vector<16x392xf32> to vector<16xf32>
    %9 = vector.shape_cast %8 : vector<16xf32> to vector<16x1xf32>
    %cst_6 = arith.constant 3.920000e+02 : f32
    %10 = vector.broadcast %cst_6 : f32 to vector<16x1xf32>
    %11 = arith.divf %9, %10 : vector<16x1xf32>
    %12 = arith.mulf %6, %6 : vector<16x1xf32>
    %13 = arith.subf %11, %12 : vector<16x1xf32>
    %cst_7 = arith.constant 0.000000e+00 : f32
    %14 = vector.broadcast %cst_7 : f32 to vector<16x1xf32>
    %15 = arith.maximumf %13, %14 : vector<16x1xf32>
    %c0_8 = arith.constant 0 : index
    %c0_9 = arith.constant 0 : index
    %16 = vector.load %arg2[%c0_8, %c0_9] : memref<16x1xf32, #tpu.memory_space<vmem>>, vector<16x1xf32>
    %cst_10 = arith.constant 9.99999974E-6 : f32
    %17 = vector.broadcast %cst_10 : f32 to vector<16x1xf32>
    %18 = arith.addf %15, %17 : vector<16x1xf32>
    %19 = math.rsqrt %18 : vector<16x1xf32>
    %20 = arith.mulf %16, %19 : vector<16x1xf32>
    %c0_11 = arith.constant 0 : index
    %c0_12 = arith.constant 0 : index
    %21 = vector.load %arg3[%c0_11, %c0_12] : memref<16x1xf32, #tpu.memory_space<vmem>>, vector<16x1xf32>
    %22 = arith.mulf %6, %20 : vector<16x1xf32>
    %23 = arith.subf %21, %22 : vector<16x1xf32>
    %24 = vector.broadcast %20 : vector<16x1xf32> to vector<16x392xf32>
    %25 = arith.mulf %2, %24 : vector<16x392xf32>
    %26 = vector.broadcast %23 : vector<16x1xf32> to vector<16x392xf32>
    %27 = arith.addf %25, %26 : vector<16x392xf32>
    %cst_13 = arith.constant 0.000000e+00 : f32
    %28 = vector.broadcast %cst_13 : f32 to vector<16x392xf32>
    %29 = arith.maximumf %27, %28 : vector<16x392xf32>
    %c0_14 = arith.constant 0 : index
    %c0_15 = arith.constant 0 : index
    %c0_16 = arith.constant 0 : index
    %30 = vector.load %arg4[%c0_14, %c0_15, %c0_16] : memref<3x16x392xf32, #tpu.memory_space<vmem>>, vector<1x16x392xf32>
    %31 = vector.shape_cast %30 : vector<1x16x392xf32> to vector<16x392xf32>
    %32 = arith.mulf %29, %31 : vector<16x392xf32>
    %cst_17 = arith.constant dense<0.000000e+00> : vector<392xf32>
    %33 = vector.multi_reduction <add>, %32, %cst_17 [0] : vector<16x392xf32> to vector<392xf32>
    %34 = vector.shape_cast %33 : vector<392xf32> to vector<1x392xf32>
    %c0_18 = arith.constant 0 : index
    %c0_19 = arith.constant 0 : index
    %35 = vector.load %arg8[%c0_18, %c0_19] : memref<3x392xf32, #tpu.memory_space<vmem>>, vector<1x392xf32>
    tpu.vector_store %arg8[%c0_18, %c0_19], %34 {strides = array<i32>} : memref<3x392xf32, #tpu.memory_space<vmem>>, vector<1x392xf32>,
    %c1 = arith.constant 1 : index
    %c0_20 = arith.constant 0 : index
    %c0_21 = arith.constant 0 : index
    %36 = vector.load %arg4[%c1, %c0_20, %c0_21] : memref<3x16x392xf32, #tpu.memory_space<vmem>>, vector<1x16x392xf32>
    %37 = vector.shape_cast %36 : vector<1x16x392xf32> to vector<16x392xf32>
    %38 = arith.mulf %29, %37 : vector<16x392xf32>
    %cst_22 = arith.constant dense<0.000000e+00> : vector<392xf32>
    %39 = vector.multi_reduction <add>, %38, %cst_22 [0] : vector<16x392xf32> to vector<392xf32>
    %40 = vector.shape_cast %39 : vector<392xf32> to vector<1x392xf32>
    %c1_23 = arith.constant 1 : index
    %c0_24 = arith.constant 0 : index
    %41 = vector.load %arg8[%c1_23, %c0_24] : memref<3x392xf32, #tpu.memory_space<vmem>>, vector<1x392xf32>
    tpu.vector_store %arg8[%c1_23, %c0_24], %40 {strides = array<i32>} : memref<3x392xf32, #tpu.memory_space<vmem>>, vector<1x392xf32>,
    %c2 = arith.constant 2 : index
    %c0_25 = arith.constant 0 : index
    %c0_26 = arith.constant 0 : index
    %42 = vector.load %arg4[%c2, %c0_25, %c0_26] : memref<3x16x392xf32, #tpu.memory_space<vmem>>, vector<1x16x392xf32>
    %43 = vector.shape_cast %42 : vector<1x16x392xf32> to vector<16x392xf32>
    %44 = arith.mulf %29, %43 : vector<16x392xf32>
    %cst_27 = arith.constant dense<0.000000e+00> : vector<392xf32>
    %45 = vector.multi_reduction <add>, %44, %cst_27 [0] : vector<16x392xf32> to vector<392xf32>
    %46 = vector.shape_cast %45 : vector<392xf32> to vector<1x392xf32>
    %c2_28 = arith.constant 2 : index
    %c0_29 = arith.constant 0 : index
    %47 = vector.load %arg8[%c2_28, %c0_29] : memref<3x392xf32, #tpu.memory_space<vmem>>, vector<1x392xf32>
    tpu.vector_store %arg8[%c2_28, %c0_29], %46 {strides = array<i32>} : memref<3x392xf32, #tpu.memory_space<vmem>>, vector<1x392xf32>,
    %c0_30 = arith.constant 0 : index
    %c0_31 = arith.constant 0 : index
    %48 = vector.load %arg8[%c0_30, %c0_31] : memref<3x392xf32, #tpu.memory_space<vmem>>, vector<3x392xf32>
    %c0_32 = arith.constant 0 : index
    %c0_33 = arith.constant 0 : index
    %49 = vector.load %arg5[%c0_32, %c0_33] : memref<392x2xf32, #tpu.memory_space<vmem>>, vector<392x2xf32>
    %cst_34 = arith.constant dense<0.000000e+00> : vector<3x2xf32>
    %50 = tpu.matmul %48, %49, %cst_34 {dimension_numbers = #tpu.dot_dimension_numbers<[1], [0], [0], [1], [0, 0, 1, 1], [], []>} : vector<3x392xf32>, vector<392x2xf32>, vector<3x2xf32> -> vector<3x2xf32>
    %c0_35 = arith.constant 0 : index
    %c0_36 = arith.constant 0 : index
    %51 = vector.load %arg6[%c0_35, %c0_36] : memref<3x1xf32, #tpu.memory_space<vmem>>, vector<3x1xf32>
    %52 = vector.broadcast %51 : vector<3x1xf32> to vector<3x2xf32>
    %53 = arith.addf %50, %52 : vector<3x2xf32>
    %cst_37 = arith.constant dense<0xFF800000> : vector<2xf32>
    %54 = vector.multi_reduction <maximumf>, %53, %cst_37 [0] : vector<3x2xf32> to vector<2xf32>
    %55 = vector.shape_cast %54 : vector<2xf32> to vector<1x2xf32>
    %56 = vector.broadcast %55 : vector<1x2xf32> to vector<3x2xf32>
    %57 = arith.subf %53, %56 : vector<3x2xf32>
    %58 = math.exp %57 : vector<3x2xf32>
    %cst_38 = arith.constant dense<0.000000e+00> : vector<2xf32>
    %59 = vector.multi_reduction <add>, %58, %cst_38 [0] : vector<3x2xf32> to vector<2xf32>
    %60 = vector.shape_cast %59 : vector<2xf32> to vector<1x2xf32>
    %61 = vector.broadcast %60 : vector<1x2xf32> to vector<3x2xf32>
    %62 = arith.divf %58, %61 : vector<3x2xf32>
    %c0_39 = arith.constant 0 : index
    %c0_40 = arith.constant 0 : index
    %63 = vector.load %arg7[%c0_39, %c0_40] : memref<3x2xf32, #tpu.memory_space<vmem>>, vector<3x2xf32>
    tpu.vector_store %arg7[%c0_39, %c0_40], %62 {strides = array<i32>} : memref<3x2xf32, #tpu.memory_space<vmem>>, vector<3x2xf32>,
    return
  }
}

</mosaic_0001>

<llo_original>
// kernel: forward.1
$region0: #{forward.1}
  #allocation0 [shape = 'u32[]', space=smem, size = 0x4, offset = 0x4, fixed_abs, tag = 'smem constant byte address 0x4 - core index']
  #allocation1 [shape = 'u32[72,128]{1,0:T(1,128)}', space=vmem, size = 0x9000, scoped, tag = 'internal scratch']
  #allocation2 [shape = 'f32[3,392]{1,0:T(4,128)}', space=vmem, size = 0x2000, scoped, tag = 'scratch operand']
  %s0 = inlined_call_operand.vmem [shape: bf16[27,392], index: 0, kind: input, shape index: {}]
  %s1 = inlined_call_operand.vmem [shape: bf16[16,27], index: 1, kind: input, shape index: {}]
  %s2 = inlined_call_operand.vmem [shape: f32[16,1], index: 2, kind: input, shape index: {}]
  %s3 = inlined_call_operand.vmem [shape: f32[16,1], index: 3, kind: input, shape index: {}]
  %s4 = inlined_call_operand.vmem [shape: f32[3,16,392], index: 4, kind: input, shape index: {}]
  %s5 = inlined_call_operand.vmem [shape: f32[392,2], index: 5, kind: input, shape index: {}]
  %s6 = inlined_call_operand.vmem [shape: f32[3,1], index: 6, kind: input, shape index: {}]
  %s7 = inlined_call_operand.vmem [shape: f32[3,2], index: 7, kind: output, shape index: {}]
  %s8 = sld [smem:[#allocation0]]
  $region38: #{forward.1} parent=0
    _
  %s10 = ssub.s32 1, %s8
  %s11 = scalar_select 0, %s10, %s8
  // Predicated region
  $region2: #{forward.1} parent=0 // pred_check
    _
  $region3: #{forward.1} parent=0 // pred_check_branch
    %13 = sbr.rel (0) target = $region5
  $region4: #{forward.1} parent=0 // pred_region
    _
  $region5: #{forward.1} parent=0 // pred_fallthru
    _
  // Predicated region
  $region6: #{forward.1} parent=0 // pred_check
    _
  $region7: #{forward.1} parent=0 // pred_check_branch
    %15 = sbr.rel (0) target = $region9
  $region8: #{forward.1} parent=0 // pred_region
    _
  $region9: #{forward.1} parent=0 // pred_fallthru
    _
  // Predicated region
  $region10: #{forward.1} parent=0 // pred_check
    _
  $region11: #{forward.1} parent=0 // pred_check_branch
    %17 = sbr.rel (0) target = $region13
  $region12: #{forward.1} parent=0 // pred_region
    _
  $region13: #{forward.1} parent=0 // pred_fallthru
    _
  // Predicated region
  $region14: #{forward.1} parent=0 // pred_check
    _
  $region15: #{forward.1} parent=0 // pred_check_branch
    %19 = sbr.rel (0) target = $region17
  $region16: #{forward.1} parent=0 // pred_region
    _
  $region17: #{forward.1} parent=0 // pred_fallthru
    _
  // Predicated region
  $region18: #{forward.1} parent=0 // pred_check
    _
  $region19: #{forward.1} parent=0 // pred_check_branch
    %21 = sbr.rel (0) target = $region21
  $region20: #{forward.1} parent=0 // pred_region
    _
  $region21: #{forward.1} parent=0 // pred_fallthru
    _
  // Predicated region
  $region22: #{forward.1} parent=0 // pred_check
    _
  $region23: #{forward.1} parent=0 // pred_check_branch
    %23 = sbr.rel (0) target = $region25
  $region24: #{forward.1} parent=0 // pred_region
    _
  $region25: #{forward.1} parent=0 // pred_fallthru
    _
  // Predicated region
  $region26: #{forward.1} parent=0 // pred_check
    _
  $region27: #{forward.1} parent=0 // pred_check_branch
    %25 = sbr.rel (0) target = $region29
  $region28: #{forward.1} parent=0 // pred_region
    _
  $region29: #{forward.1} parent=0 // pred_fallthru
    _
  %v27 = vld [vmem:[%s1] sm:$0xf]
  %v28 = vld [vmem:[%s1 + $0x4] sm:$0xf]
  %v29 = vld [vmem:[%s0] sm:$0xff]
  %v30 = vld [vmem:[%s0 + $0x8] sm:$0xff]
  %v31 = vld [vmem:[%s0 + $0x10] sm:$0xff]
  %v32 = vld [vmem:[%s0 + $0x18] sm:$0xff]
  %v33 = vld [vmem:[%s0 + $0x20] sm:$0xff]
  %v34 = vld [vmem:[%s0 + $0x28] sm:$0xff]
  %v35 = vld [vmem:[%s0 + $0x30] sm:$0x33]
  %v36 = vld [vmem:[%s0 + $0x38] sm:$0x33]
  %v39 = vunpack.c.l.b16 %v27
  %v40 = vunpack.c.l.b16 %v28
  %v41 = vpack.c.b16 %v40, %v39
  %v50 = vunpack.c.l.b16 %v29
  %v51 = vunpack.c.h.b16 %v29
  %v52 = vunpack.c.l.b16 %v30
  %v53 = vunpack.c.h.b16 %v30
  %v54 = vunpack.c.l.b16 %v31
  %v55 = vunpack.c.h.b16 %v31
  %v56 = vunpack.c.l.b16 %v32
  %v57 = vunpack.c.h.b16 %v32
  %v58 = vunpack.c.l.b16 %v33
  %v59 = vunpack.c.h.b16 %v33
  %v60 = vunpack.c.l.b16 %v34
  %v61 = vunpack.c.h.b16 %v34
  %v62 = vunpack.c.l.b16 %v35
  %v63 = vunpack.c.h.b16 %v35
  %v64 = vunpack.c.l.b16 %v36
  %v65 = vunpack.c.h.b16 %v36
  %v66 = vpack.c.b16 %v54, %v50
  %v67 = vpack.c.b16 %v55, %v51
  %v68 = vpack.c.b16 %v56, %v52
  %v69 = vpack.c.b16 %v57, %v53
  %v70 = vpack.c.b16 %v62, %v58
  %v71 = vpack.c.b16 %v63, %v59
  %v72 = vpack.c.b16 %v64, %v60
  %v73 = vpack.c.b16 %v65, %v61
  %vm78 = vcmask 220160
  %v80 = vsel %vm78, %v41, 0
  %vm82 = vcmask 1044480
  %vm83 = vcmask 1045504
  %v84 = vsel %vm82, 4294967295, 65535
  %v85 = vsel %vm83, %v84, 0
  %v87 = vand.u32 %v70, %v85
  %v90 = vand.u32 %v71, %v85
  %v93 = vand.u32 %v72, %v85
  %v96 = vand.u32 %v73, %v85
  %98 = vmatpush.bf16.msra.mxu0 0
  %99 = vmatpush.bf16.msra.mxu0 0
  %100 = vmatpush.bf16.msra.mxu0 0
  %101 = vmatpush.bf16.msra.mxu0 0
  %102 = vmatpush.bf16.msra.mxu0 0
  %103 = vmatpush.bf16.msra.mxu0 0
  %104 = vmatpush.bf16.msra.mxu0 %v87
  %105 = vmatpush.bf16.msra.mxu0 %v66
  %106 = vmatmul.bf16.gmra.mxu0 %v80
  %v107 = vpop.f32.mrf.mxu0
  %v108 = vadd.f32 0.0, %v107
  %v109 = vpop.f32.mrf.mxu0
  %v110 = vadd.f32 0.0, %v109
  %111 = vdwg.mxu0
  %112 = vmatpush.bf16.msra.mxu0 0
  %113 = vmatpush.bf16.msra.mxu0 0
  %114 = vmatpush.bf16.msra.mxu0 0
  %115 = vmatpush.bf16.msra.mxu0 0
  %116 = vmatpush.bf16.msra.mxu0 0
  %117 = vmatpush.bf16.msra.mxu0 0
  %118 = vmatpush.bf16.msra.mxu0 %v90
  %119 = vmatpush.bf16.msra.mxu0 %v67
  %120 = vmatmul.bf16.gmra.mxu0 %v80
  %v121 = vpop.f32.mrf.mxu0
  %v122 = vadd.f32 0.0, %v121
  %v123 = vpop.f32.mrf.mxu0
  %v124 = vadd.f32 0.0, %v123
  %125 = vdwg.mxu0
  %126 = vmatpush.bf16.msra.mxu0 0
  %127 = vmatpush.bf16.msra.mxu0 0
  %128 = vmatpush.bf16.msra.mxu0 0
  %129 = vmatpush.bf16.msra.mxu0 0
  %130 = vmatpush.bf16.msra.mxu0 0
  %131 = vmatpush.bf16.msra.mxu0 0
  %132 = vmatpush.bf16.msra.mxu0 %v93
  %133 = vmatpush.bf16.msra.mxu0 %v68
  %134 = vmatmul.bf16.gmra.mxu0 %v80
  %v135 = vpop.f32.mrf.mxu0
  %v136 = vadd.f32 0.0, %v135
  %v137 = vpop.f32.mrf.mxu0
  %v138 = vadd.f32 0.0, %v137
  %139 = vdwg.mxu0
  %140 = vmatpush.bf16.msra.mxu0 0
  %141 = vmatpush.bf16.msra.mxu0 0
  %142 = vmatpush.bf16.msra.mxu0 0
  %143 = vmatpush.bf16.msra.mxu0 0
  %144 = vmatpush.bf16.msra.mxu0 0
  %145 = vmatpush.bf16.msra.mxu0 0
  %146 = vmatpush.bf16.msra.mxu0 %v96
  %147 = vmatpush.bf16.msra.mxu0 %v69
  %148 = vmatmul.bf16.gmra.mxu0 %v80
  %v149 = vpop.f32.mrf.mxu0
  %v150 = vadd.f32 0.0, %v149
  %v151 = vpop.f32.mrf.mxu0
  %v152 = vadd.f32 0.0, %v151
  %153 = vdwg.mxu0
  %v154 = vadd.f32 %v108, %v122
  %v155 = vadd.f32 %v154, %v136
  %vm156 = vcmask 64512
  %v157 = vsel %vm156, %v150, 0.0
  %v158 = vadd.f32 %v155, %v157
  %159 = vadd.xlane.f32.xlu0 %v158
  %v160 = vpop.xlane.xlu0 %159
  %v161 = vadd.f32 %v110, %v124
  %v162 = vadd.f32 %v161, %v138
  %v163 = vsel %vm156, %v152, 0.0
  %v164 = vadd.f32 %v162, %v163
  %165 = vadd.xlane.f32.xlu0 %v164
  %v166 = vpop.xlane.xlu0 %165
  %v167 = vrcp.pop 392.0
  %v168 = vmul.f32 392.0, %v167
  %v169 = vsub.f32 1.0, %v168
  %v170 = vmul.f32 %v167, %v169
  %v171 = vadd.f32 %v167, %v170
  %vm172 = vweird.f32 %v167
  %v173 = vsel %vm172, %v167, %v171
  %v174 = vmul.f32 %v160, %v173
  %v175 = vmul.f32 %v166, %v173
  %v176 = vmul.f32 %v108, %v108
  %v177 = vmul.f32 %v122, %v122
  %v178 = vmul.f32 %v136, %v136
  %v179 = vmul.f32 %v150, %v150
  %v180 = vmul.f32 %v110, %v110
  %v181 = vmul.f32 %v124, %v124
  %v182 = vmul.f32 %v138, %v138
  %v183 = vmul.f32 %v152, %v152
  %v184 = vadd.f32 %v176, %v177
  %v185 = vadd.f32 %v184, %v178
  %v186 = vsel %vm156, %v179, 0.0
  %v187 = vadd.f32 %v185, %v186
  %188 = vadd.xlane.f32.xlu0 %v187
  %v189 = vpop.xlane.xlu0 %188
  %v190 = vadd.f32 %v180, %v181
  %v191 = vadd.f32 %v190, %v182
  %v192 = vsel %vm156, %v183, 0.0
  %v193 = vadd.f32 %v191, %v192
  %194 = vadd.xlane.f32.xlu0 %v193
  %v195 = vpop.xlane.xlu0 %194
  %v196 = vmul.f32 %v189, %v173
  %v197 = vmul.f32 %v195, %v173
  %v198 = vmul.f32 %v174, %v174
  %v199 = vmul.f32 %v175, %v175
  %v200 = vsub.f32 %v196, %v198
  %v201 = vsub.f32 %v197, %v199
  %v202 = vmax.f32 %v200, 0.0
  %v203 = vmax.f32 %v201, 0.0
  %v204 = vld [vmem:[%s2] sm:$0xff]
  %v205 = vld [vmem:[%s2 + $0x8] sm:$0xff]
  %v206 = vadd.f32 %v202, 1e-05
  %v207 = vadd.f32 %v203, 1e-05
  %v208 = vrsqrt.pop %v206
  %v209 = vmul.f32 %v208, %v206
  %v210 = vmul.f32 %v209, %v208
  %v211 = vmul.f32 0.5, %v210
  %v212 = vsub.f32 1.5, %v211
  %v213 = vmul.f32 %v208, %v212
  %vm214 = vweird.f32 %v206
  %vm215 = vweird.f32 %v208
  %vm216 = vmor %vm214, %vm215
  %v217 = vsel %vm216, %v208, %v213
  %v218 = vrsqrt.pop %v207
  %v219 = vmul.f32 %v218, %v207
  %v220 = vmul.f32 %v219, %v218
  %v221 = vmul.f32 0.5, %v220
  %v222 = vsub.f32 1.5, %v221
  %v223 = vmul.f32 %v218, %v222
  %vm224 = vweird.f32 %v207
  %vm225 = vweird.f32 %v218
  %vm226 = vmor %vm224, %vm225
  %v227 = vsel %vm226, %v218, %v223
  %v228 = vmul.f32 %v204, %v217
  %v229 = vmul.f32 %v205, %v227
  %v230 = vld [vmem:[%s3] sm:$0xff]
  %v231 = vld [vmem:[%s3 + $0x8] sm:$0xff]
  %v232 = vmul.f32 %v174, %v228
  %v233 = vmul.f32 %v175, %v229
  %v234 = vsub.f32 %v230, %v232
  %v235 = vsub.f32 %v231, %v233
  %237 = vset.pattern.permute.xlu0 0
  %238 = vperm.xlu0 %237, %v228
  %v239 = vpop.permute.xlu0 %238
  %242 = vset.pattern.permute.xlu0 0
  %243 = vperm.xlu0 %242, %v229
  %v244 = vpop.permute.xlu0 %243
  %v246 = vmul.f32 %v108, %v239
  %v247 = vmul.f32 %v122, %v239
  %v248 = vmul.f32 %v136, %v239
  %v249 = vmul.f32 %v150, %v239
  %v250 = vmul.f32 %v110, %v244
  %v251 = vmul.f32 %v124, %v244
  %v252 = vmul.f32 %v138, %v244
  %v253 = vmul.f32 %v152, %v244
  %255 = vset.pattern.permute.xlu0 0
  %256 = vperm.xlu0 %255, %v234
  %v257 = vpop.permute.xlu0 %256
  %260 = vset.pattern.permute.xlu0 0
  %261 = vperm.xlu0 %260, %v235
  %v262 = vpop.permute.xlu0 %261
  %v264 = vadd.f32 %v246, %v257
  %v265 = vadd.f32 %v247, %v257
  %v266 = vadd.f32 %v248, %v257
  %v267 = vadd.f32 %v249, %v257
  %v268 = vadd.f32 %v250, %v262
  %v269 = vadd.f32 %v251, %v262
  %v270 = vadd.f32 %v252, %v262
  %v271 = vadd.f32 %v253, %v262
  %v272 = vmax.f32 %v264, 0.0
  %v273 = vmax.f32 %v265, 0.0
  %v274 = vmax.f32 %v266, 0.0
  %v275 = vmax.f32 %v267, 0.0
  %v276 = vmax.f32 %v268, 0.0
  %v277 = vmax.f32 %v269, 0.0
  %v278 = vmax.f32 %v270, 0.0
  %v279 = vmax.f32 %v271, 0.0
  %v280 = vld [vmem:[%s4] sm:$0xff]
  %v281 = vld [vmem:[%s4 + $0x8] sm:$0xff]
  %v282 = vld [vmem:[%s4 + $0x10] sm:$0xff]
  %v283 = vld [vmem:[%s4 + $0x18] sm:$0xff]
  %v284 = vld [vmem:[%s4 + $0x20] sm:$0xff]
  %v285 = vld [vmem:[%s4 + $0x28] sm:$0xff]
  %v286 = vld [vmem:[%s4 + $0x30] sm:$0xff]
  %v287 = vld [vmem:[%s4 + $0x38] sm:$0xff]
  %v288 = vmul.f32 %v272, %v280
  %v289 = vmul.f32 %v273, %v281
  %v290 = vmul.f32 %v274, %v282
  %v291 = vmul.f32 %v275, %v283
  %v292 = vmul.f32 %v276, %v284
  %v293 = vmul.f32 %v277, %v285
  %v294 = vmul.f32 %v278, %v286
  %v295 = vmul.f32 %v279, %v287
  %v296 = vadd.f32 %v288, %v292
  %v297 = vrot.slane %v296, 4
  %v298 = vadd.f32 %v296, %v297
  %v299 = vrot.slane %v298, 2
  %v300 = vadd.f32 %v298, %v299
  %v301 = vrot.slane %v300, 1
  %v302 = vadd.f32 %v300, %v301
  %v303 = vadd.f32 %v289, %v293
  %v304 = vrot.slane %v303, 4
  %v305 = vadd.f32 %v303, %v304
  %v306 = vrot.slane %v305, 2
  %v307 = vadd.f32 %v305, %v306
  %v308 = vrot.slane %v307, 1
  %v309 = vadd.f32 %v307, %v308
  %v310 = vadd.f32 %v290, %v294
  %v311 = vrot.slane %v310, 4
  %v312 = vadd.f32 %v310, %v311
  %v313 = vrot.slane %v312, 2
  %v314 = vadd.f32 %v312, %v313
  %v315 = vrot.slane %v314, 1
  %v316 = vadd.f32 %v314, %v315
  %v317 = vsel %vm156, %v291, 0.0
  %v318 = vsel %vm156, %v295, 0.0
  %v319 = vadd.f32 %v317, %v318
  %v320 = vrot.slane %v319, 4
  %v321 = vadd.f32 %v319, %v320
  %v322 = vrot.slane %v321, 2
  %v323 = vadd.f32 %v321, %v322
  %v324 = vrot.slane %v323, 1
  %v325 = vadd.f32 %v323, %v324
  %v330 = vrot.slane %v309, 7
  %v331 = vrot.slane %v316, 6
  %v332 = vrot.slane %v325, 5
  %vm333 = vcmask 1040384
  %v334 = vsel %vm333, %v302, %v330
  %vm335 = vcmask 1042434
  %v336 = vsel %vm335, %v331, %v332
  %vm337 = vcmask 1041408
  %v338 = vsel %vm337, %v334, %v336
  %v340 = vlaneseq
  %vm341 = vcmp.ge.s32.totalorder %v340, 0
  %vm342 = vcmp.lt.s32.totalorder %v340, 392
  %vm343 = vmand %vm341, %vm342
  %344 = vst.msk [vmem:[#allocation2] ss:$4 sm:$0xf] %vm343, %v338
  %s345 = scalar_lea.vmem %s4, 64
  %v346 = vld [vmem:[%s345] sm:$0xff]
  %v347 = vld [vmem:[%s345 + $0x8] sm:$0xff]
  %v348 = vld [vmem:[%s345 + $0x10] sm:$0xff]
  %v349 = vld [vmem:[%s345 + $0x18] sm:$0xff]
  %v350 = vld [vmem:[%s345 + $0x20] sm:$0xff]
  %v351 = vld [vmem:[%s345 + $0x28] sm:$0xff]
  %v352 = vld [vmem:[%s345 + $0x30] sm:$0xff]
  %v353 = vld [vmem:[%s345 + $0x38] sm:$0xff]
  %v354 = vmul.f32 %v272, %v346
  %v355 = vmul.f32 %v273, %v347
  %v356 = vmul.f32 %v274, %v348
  %v357 = vmul.f32 %v275, %v349
  %v358 = vmul.f32 %v276, %v350
  %v359 = vmul.f32 %v277, %v351
  %v360 = vmul.f32 %v278, %v352
  %v361 = vmul.f32 %v279, %v353
  %v362 = vadd.f32 %v354, %v358
  %v363 = vrot.slane %v362, 4
  %v364 = vadd.f32 %v362, %v363
  %v365 = vrot.slane %v364, 2
  %v366 = vadd.f32 %v364, %v365
  %v367 = vrot.slane %v366, 1
  %v368 = vadd.f32 %v366, %v367
  %v369 = vadd.f32 %v355, %v359
  %v370 = vrot.slane %v369, 4
  %v371 = vadd.f32 %v369, %v370
  %v372 = vrot.slane %v371, 2
  %v373 = vadd.f32 %v371, %v372
  %v374 = vrot.slane %v373, 1
  %v375 = vadd.f32 %v373, %v374
  %v376 = vadd.f32 %v356, %v360
  %v377 = vrot.slane %v376, 4
  %v378 = vadd.f32 %v376, %v377
  %v379 = vrot.slane %v378, 2
  %v380 = vadd.f32 %v378, %v379
  %v381 = vrot.slane %v380, 1
  %v382 = vadd.f32 %v380, %v381
  %v383 = vsel %vm156, %v357, 0.0
  %v384 = vsel %vm156, %v361, 0.0
  %v385 = vadd.f32 %v383, %v384
  %v386 = vrot.slane %v385, 4
  %v387 = vadd.f32 %v385, %v386
  %v388 = vrot.slane %v387, 2
  %v389 = vadd.f32 %v387, %v388
  %v390 = vrot.slane %v389, 1
  %v391 = vadd.f32 %v389, %v390
  %v396 = vrot.slane %v375, 7
  %v397 = vrot.slane %v382, 6
  %v398 = vrot.slane %v391, 5
  %v399 = vsel %vm333, %v368, %v396
  %v400 = vsel %vm335, %v397, %v398
  %v401 = vsel %vm337, %v399, %v400
  %s403 = scalar_lea.vmem [#allocation2], 1
  %404 = vst.msk [vmem:[%s403] ss:$4 sm:$0xf] %vm343, %v401
  %s405 = scalar_lea.vmem %s4, 128
  %v406 = vld [vmem:[%s405] sm:$0xff]
  %v407 = vld [vmem:[%s405 + $0x8] sm:$0xff]
  %v408 = vld [vmem:[%s405 + $0x10] sm:$0xff]
  %v409 = vld [vmem:[%s405 + $0x18] sm:$0xff]
  %v410 = vld [vmem:[%s405 + $0x20] sm:$0xff]
  %v411 = vld [vmem:[%s405 + $0x28] sm:$0xff]
  %v412 = vld [vmem:[%s405 + $0x30] sm:$0xff]
  %v413 = vld [vmem:[%s405 + $0x38] sm:$0xff]
  %v414 = vmul.f32 %v272, %v406
  %v415 = vmul.f32 %v273, %v407
  %v416 = vmul.f32 %v274, %v408
  %v417 = vmul.f32 %v275, %v409
  %v418 = vmul.f32 %v276, %v410
  %v419 = vmul.f32 %v277, %v411
  %v420 = vmul.f32 %v278, %v412
  %v421 = vmul.f32 %v279, %v413
  %v422 = vadd.f32 %v414, %v418
  %v423 = vrot.slane %v422, 4
  %v424 = vadd.f32 %v422, %v423
  %v425 = vrot.slane %v424, 2
  %v426 = vadd.f32 %v424, %v425
  %v427 = vrot.slane %v426, 1
  %v428 = vadd.f32 %v426, %v427
  %v429 = vadd.f32 %v415, %v419
  %v430 = vrot.slane %v429, 4
  %v431 = vadd.f32 %v429, %v430
  %v432 = vrot.slane %v431, 2
  %v433 = vadd.f32 %v431, %v432
  %v434 = vrot.slane %v433, 1
  %v435 = vadd.f32 %v433, %v434
  %v436 = vadd.f32 %v416, %v420
  %v437 = vrot.slane %v436, 4
  %v438 = vadd.f32 %v436, %v437
  %v439 = vrot.slane %v438, 2
  %v440 = vadd.f32 %v438, %v439
  %v441 = vrot.slane %v440, 1
  %v442 = vadd.f32 %v440, %v441
  %v443 = vsel %vm156, %v417, 0.0
  %v444 = vsel %vm156, %v421, 0.0
  %v445 = vadd.f32 %v443, %v444
  %v446 = vrot.slane %v445, 4
  %v447 = vadd.f32 %v445, %v446
  %v448 = vrot.slane %v447, 2
  %v449 = vadd.f32 %v447, %v448
  %v450 = vrot.slane %v449, 1
  %v451 = vadd.f32 %v449, %v450
  %v456 = vrot.slane %v435, 7
  %v457 = vrot.slane %v442, 6
  %v458 = vrot.slane %v451, 5
  %v459 = vsel %vm333, %v428, %v456
  %v460 = vsel %vm335, %v457, %v458
  %v461 = vsel %vm337, %v459, %v460
  %s463 = scalar_lea.vmem [#allocation2], 2
  %464 = vst.msk [vmem:[%s463] ss:$4 sm:$0xf] %vm343, %v461
  %v465 = vld [vmem:[#allocation2] sm:$0x77]
  %v466 = vld [vmem:[#allocation2 + $0x8] sm:$0x77]
  %v467 = vld [vmem:[%s5] sm:$0xff]
  %v468 = vld [vmem:[%s5 + $0x8] sm:$0xff]
  %v469 = vld [vmem:[%s5 + $0x10] sm:$0xff]
  %v470 = vld [vmem:[%s5 + $0x18] sm:$0xff]
  %v471 = vld [vmem:[%s5 + $0x20] sm:$0xff]
  %v472 = vld [vmem:[%s5 + $0x28] sm:$0xff]
  %v473 = vld [vmem:[%s5 + $0x30] sm:$0xff]
  %v474 = vld [vmem:[%s5 + $0x38] sm:$0xff]
  %v475 = vld [vmem:[%s5 + $0x40] sm:$0xff]
  %v476 = vld [vmem:[%s5 + $0x48] sm:$0xff]
  %v477 = vld [vmem:[%s5 + $0x50] sm:$0xff]
  %v478 = vld [vmem:[%s5 + $0x58] sm:$0xff]
  %v479 = vld [vmem:[%s5 + $0x60] sm:$0xff]
  %v480 = vld [vmem:[%s5 + $0x68] sm:$0xff]
  %v481 = vld [vmem:[%s5 + $0x70] sm:$0xff]
  %v482 = vld [vmem:[%s5 + $0x78] sm:$0xff]
  %v483 = vld [vmem:[%s5 + $0x80] sm:$0xff]
  %v484 = vld [vmem:[%s5 + $0x88] sm:$0xff]
  %v485 = vld [vmem:[%s5 + $0x90] sm:$0xff]
  %v486 = vld [vmem:[%s5 + $0x98] sm:$0xff]
  %v487 = vld [vmem:[%s5 + $0xa0] sm:$0xff]
  %v488 = vld [vmem:[%s5 + $0xa8] sm:$0xff]
  %v489 = vld [vmem:[%s5 + $0xb0] sm:$0xff]
  %v490 = vld [vmem:[%s5 + $0xb8] sm:$0xff]
  %v491 = vld [vmem:[%s5 + $0xc0] sm:$0xff]
  %v492 = vld [vmem:[%s5 + $0xc8] sm:$0xff]
  %v493 = vld [vmem:[%s5 + $0xd0] sm:$0xff]
  %v494 = vld [vmem:[%s5 + $0xd8] sm:$0xff]
  %v495 = vld [vmem:[%s5 + $0xe0] sm:$0xff]
  %v496 = vld [vmem:[%s5 + $0xe8] sm:$0xff]
  %v497 = vld [vmem:[%s5 + $0xf0] sm:$0xff]
  %v498 = vld [vmem:[%s5 + $0xf8] sm:$0xff]
  %v499 = vld [vmem:[%s5 + $0x100] sm:$0xff]
  %v500 = vld [vmem:[%s5 + $0x108] sm:$0xff]
  %v501 = vld [vmem:[%s5 + $0x110] sm:$0xff]
  %v502 = vld [vmem:[%s5 + $0x118] sm:$0xff]
  %v503 = vld [vmem:[%s5 + $0x120] sm:$0xff]
  %v504 = vld [vmem:[%s5 + $0x128] sm:$0xff]
  %v505 = vld [vmem:[%s5 + $0x130] sm:$0xff]
  %v506 = vld [vmem:[%s5 + $0x138] sm:$0xff]
  %v507 = vld [vmem:[%s5 + $0x140] sm:$0xff]
  %v508 = vld [vmem:[%s5 + $0x148] sm:$0xff]
  %v509 = vld [vmem:[%s5 + $0x150] sm:$0xff]
  %v510 = vld [vmem:[%s5 + $0x158] sm:$0xff]
  %v511 = vld [vmem:[%s5 + $0x160] sm:$0xff]
  %v512 = vld [vmem:[%s5 + $0x168] sm:$0xff]
  %v513 = vld [vmem:[%s5 + $0x170] sm:$0xff]
  %v514 = vld [vmem:[%s5 + $0x178] sm:$0xff]
  %v515 = vld [vmem:[%s5 + $0x180] sm:$0xff]
  %v516 = vld [vmem:[%s6] sm:$0x7]
  %518 = vset.pattern.permute.xlu0 0
  %519 = vperm.xlu0 %518, %v516
  %v520 = vpop.permute.xlu0 %519
  %524 = vst [vmem:[#allocation1] ss:$2 sm:$0xff] %v465
  %s525 = scalar_lea.vmem [#allocation1], 16
  %526 = vst [vmem:[%s525] ss:$2 sm:$0xff] %v466
  %v527 = vld.sshfl [vmem:[#allocation1] sm:$0xff pattern:$0x75316420]
  %v528 = vld.sshfl [vmem:[#allocation1 + $0x8] sm:$0xff pattern:$0x75316420]
  %v529 = vld.sshfl [vmem:[#allocation1 + $0x10] sm:$0xff pattern:$0x75316420]
  %v530 = vld.sshfl [vmem:[#allocation1 + $0x18] sm:$0xff pattern:$0x75316420]
  %v534 = vsel %vm156, %v530, 0
  %536 = vmatpush.msra.mxu0 %v482
  %537 = vmatpush.msra.mxu0 %v481
  %538 = vmatpush.msra.mxu0 %v480
  %539 = vmatpush.msra.mxu0 %v479
  %540 = vmatpush.msra.mxu0 %v478
  %541 = vmatpush.msra.mxu0 %v477
  %542 = vmatpush.msra.mxu0 %v476
  %543 = vmatpush.msra.mxu0 %v475
  %544 = vmatpush.msra.mxu0 %v474
  %545 = vmatpush.msra.mxu0 %v473
  %546 = vmatpush.msra.mxu0 %v472
  %547 = vmatpush.msra.mxu0 %v471
  %548 = vmatpush.msra.mxu0 %v470
  %549 = vmatpush.msra.mxu0 %v469
  %550 = vmatpush.msra.mxu0 %v468
  %551 = vmatpush.msra.mxu0 %v467
  %552 = vmatmul.f32.gmra.mxu0 %v527
  %v553 = vpop.f32.mrf.mxu0
  %v554 = vadd.f32 %v520, %v553
  %555 = vdwg.mxu0
  %556 = vmatpush.msra.mxu0 %v498
  %557 = vmatpush.msra.mxu0 %v497
  %558 = vmatpush.msra.mxu0 %v496
  %559 = vmatpush.msra.mxu0 %v495
  %560 = vmatpush.msra.mxu0 %v494
  %561 = vmatpush.msra.mxu0 %v493
  %562 = vmatpush.msra.mxu0 %v492
  %563 = vmatpush.msra.mxu0 %v491
  %564 = vmatpush.msra.mxu0 %v490
  %565 = vmatpush.msra.mxu0 %v489
  %566 = vmatpush.msra.mxu0 %v488
  %567 = vmatpush.msra.mxu0 %v487
  %568 = vmatpush.msra.mxu0 %v486
  %569 = vmatpush.msra.mxu0 %v485
  %570 = vmatpush.msra.mxu0 %v484
  %571 = vmatpush.msra.mxu0 %v483
  %572 = vmatmul.f32.gmra.mxu0 %v528
  %v573 = vpop.f32.mrf.mxu0
  %v574 = vadd.f32 %v554, %v573
  %575 = vdwg.mxu0
  %576 = vmatpush.msra.mxu0 %v514
  %577 = vmatpush.msra.mxu0 %v513
  %578 = vmatpush.msra.mxu0 %v512
  %579 = vmatpush.msra.mxu0 %v511
  %580 = vmatpush.msra.mxu0 %v510
  %581 = vmatpush.msra.mxu0 %v509
  %582 = vmatpush.msra.mxu0 %v508
  %583 = vmatpush.msra.mxu0 %v507
  %584 = vmatpush.msra.mxu0 %v506
  %585 = vmatpush.msra.mxu0 %v505
  %586 = vmatpush.msra.mxu0 %v504
  %587 = vmatpush.msra.mxu0 %v503
  %588 = vmatpush.msra.mxu0 %v502
  %589 = vmatpush.msra.mxu0 %v501
  %590 = vmatpush.msra.mxu0 %v500
  %591 = vmatpush.msra.mxu0 %v499
  %592 = vmatmul.f32.gmra.mxu0 %v529
  %v593 = vpop.f32.mrf.mxu0
  %v594 = vadd.f32 %v574, %v593
  %595 = vdwg.mxu0
  %596 = vmatpush.msra.mxu0 0.0
  %597 = vmatpush.msra.mxu0 0.0
  %598 = vmatpush.msra.mxu0 0.0
  %599 = vmatpush.msra.mxu0 0.0
  %600 = vmatpush.msra.mxu0 0.0
  %601 = vmatpush.msra.mxu0 0.0
  %602 = vmatpush.msra.mxu0 0.0
  %603 = vmatpush.msra.mxu0 0.0
  %604 = vmatpush.msra.mxu0 0.0
  %605 = vmatpush.msra.mxu0 0.0
  %606 = vmatpush.msra.mxu0 0.0
  %607 = vmatpush.msra.mxu0 0.0
  %608 = vmatpush.msra.mxu0 0.0
  %609 = vmatpush.msra.mxu0 0.0
  %610 = vmatpush.msra.mxu0 0.0
  %611 = vmatpush.msra.mxu0 %v515
  %612 = vmatmul.f32.gmra.mxu0 %v534
  %v613 = vpop.f32.mrf.mxu0
  %v614 = vadd.f32 %v594, %v613
  %615 = vdwg.mxu0
  %vm616 = vcmask 10240
  %v617 = vsel %vm616, %v614, -inf
  %v618 = vrot.slane %v617, 4
  %v619 = vmax.f32 %v617, %v618
  %v620 = vrot.slane %v619, 2
  %v621 = vmax.f32 %v619, %v620
  %v622 = vrot.slane %v621, 1
  %v623 = vmax.f32 %v621, %v622
  %v624 = vsub.f32 %v614, %v623
  %v625 = vmul.f32 %v624, 1.442695
  %v626 = vpow.pop %v625
  %v627 = vsel %vm616, %v626, 0.0
  %v628 = vrot.slane %v627, 4
  %v629 = vadd.f32 %v627, %v628
  %v630 = vrot.slane %v629, 2
  %v631 = vadd.f32 %v629, %v630
  %v632 = vrot.slane %v631, 1
  %v633 = vadd.f32 %v631, %v632
  %v634 = vrcp.pop %v633
  %v635 = vmul.f32 %v633, %v634
  %v636 = vsub.f32 1.0, %v635
  %v637 = vmul.f32 %v634, %v636
  %v638 = vadd.f32 %v634, %v637
  %vm639 = vweird.f32 %v633
  %vm640 = vweird.f32 %v634
  %vm641 = vmor %vm639, %vm640
  %v642 = vsel %vm641, %v634, %v638
  %v643 = vand.u32 2147483647, %v633
  %vm644 = vcmp.eq.f32.partialorder %v643, 8.507059e+37
  %v645 = vand.u32 %v633, 2147483648
  %v646 = vor.u32 1.1754944e-38, %v645
  %v647 = vsel %vm644, %v646, %v642
  %v648 = vmul.f32 %v626, %v647
  %649 = vst.msk [vmem:[%s7] sm:$0x7] %vm616, %v648
  // Predicated region
  $region30: #{forward.1} parent=0 // pred_check
    _
  $region31: #{forward.1} parent=0 // pred_check_branch
    %651 = sbr.rel (0) target = $region33
  $region32: #{forward.1} parent=0 // pred_region
    _
  $region33: #{forward.1} parent=0 // pred_fallthru
    _
  // Predicated region
  $region34: #{forward.1} parent=0 // pred_check
    _
  $region35: #{forward.1} parent=0 // pred_check_branch
    %653 = sbr.rel (0) target = $region37
  $region36: #{forward.1} parent=0 // pred_region
    _
  $region37: #{forward.1} parent=0 // pred_fallthru
    _

</llo_original>
